<compile_context>
chip_gen: v5e
topology: v5e:2x2
jax: 0.10.0
libtpu: 0.0.40
codegen_flags: <defaults>
</compile_context>

<pallas_src>
import functools

import jax
import jax.numpy as jnp
from jax import lax
from jax.experimental import pallas as pl
from jax.experimental.pallas import tpu as pltpu


# ----------------------------------------------------------------------------
# Kernel 1: per-row (per sample-joint) 0.5 * mean((pred - gt)^2) over H*W.
# ----------------------------------------------------------------------------
def _row_mse_kernel(pred_ref, gt_ref, out_ref, *, inv_hw_half):
    # pred_ref / gt_ref: (TILE_ROWS, H*W) in VMEM; out_ref: (TILE_ROWS, 1).
    d = pred_ref[...].astype(jnp.float32) - gt_ref[...].astype(jnp.float32)
    out_ref[...] = jnp.sum(d * d, axis=-1, keepdims=True) * inv_hw_half


# ----------------------------------------------------------------------------
# Kernel 2: (optionally) apply target-weight^2, top-k per sample, batch mean.
# Iterative top-k: extract the row max, mask only its first occurrence
# (tie-correct w.r.t. torch.topk's *sum*), repeat `topk` times.
# ----------------------------------------------------------------------------
def _topk_mean(vals, topk):
    n, k = vals.shape
    col = lax.broadcasted_iota(jnp.int32, vals.shape, 1)
    total = jnp.zeros((n, 1), jnp.float32)
    cur = vals
    for _ in range(topk):
        m = jnp.max(cur, axis=-1, keepdims=True)                      # (N, 1)
        total = total + m
        is_max = cur == m
        first = jnp.min(jnp.where(is_max, col, k), axis=-1, keepdims=True)
        cur = jnp.where(col == first, -jnp.inf, cur)
    return jnp.sum(total) / jnp.float32(topk * n)


def _ohkm_weighted_kernel(loss_ref, w_ref, out_ref, *, topk):
    vals = loss_ref[...].astype(jnp.float32)
    w = w_ref[...].astype(jnp.float32)
    out_ref[0, 0] = _topk_mean(vals * (w * w), topk)


def _ohkm_plain_kernel(loss_ref, out_ref, *, topk):
    out_ref[0, 0] = _topk_mean(loss_ref[...].astype(jnp.float32), topk)


# ----------------------------------------------------------------------------
# Tile / VMEM planning
# ----------------------------------------------------------------------------
def _cdiv(a, b):
    return -(-a // b)


def _round_up(a, b):
    return _cdiv(a, b) * b


def _plan_tiles(nk, hw, itemsize):
    """Pick (tile_rows, vmem_limit_bytes) for the row-MSE kernel."""
    try:
        info = pltpu.get_tpu_info()
        vmem_cap = int(getattr(info, "vmem_capacity_bytes", 64 * 1024 * 1024))
    except Exception:
        vmem_cap = 64 * 1024 * 1024  # v7x per-TC capacity: most conservative.

    # Sub-32-bit dtypes pack along sublanes: f32 -> 8 rows, bf16 -> 16, 8-bit -> 32.
    itemsize = max(int(itemsize), 1)
    row_align = 8 * max(1, 4 // itemsize) if itemsize <= 4 else 8

    # Target ~8 MiB per input block, but never more than ~1/5 of usable VMEM
    # (2 inputs x 2 pipeline buffers + output buffers + compiler scratch).
    block_bytes = min(8 * 1024 * 1024, (vmem_cap * 3 // 4) // 5)
    rows_cap = max(row_align,
                   (block_bytes // (itemsize * max(hw, 1))) // row_align * row_align)
    tile_rows = min(rows_cap, _round_up(nk, row_align))

    # v7x has 2 TensorCores sharing the "parallel" grid axis: keep >= 2 tiles
    # so both cores get work whenever the problem is splittable.
    if _cdiv(nk, tile_rows) < 2 and nk > row_align:
        tile_rows = _round_up(_cdiv(nk, 2), row_align)

    block_actual = tile_rows * hw * itemsize
    needed = 4 * block_actual + 2 * tile_rows * 4 + (4 << 20)  # + slack
    vmem_limit = max(needed, 32 << 20)
    vmem_limit = int(min(vmem_limit, max(vmem_cap - (8 << 20), needed)))
    return tile_rows, vmem_limit


# ----------------------------------------------------------------------------
# Wrapper
# ----------------------------------------------------------------------------
def joints_ohkm_mse_loss(output, target, target_weight, *,
                         use_target_weight=True, topk=8):
    """output/target: (N, K, H, W); target_weight: (N, K, 1) or (N, K) -> scalar f32."""
    N, K, H, W = output.shape
    assert topk <= K, "topk must not exceed num_joints"
    hw = H * W
    nk = N * K
    itemsize = jnp.dtype(output.dtype).itemsize

    pred = output.reshape(nk, hw)
    gt = target.reshape(nk, hw)

    tile_rows, vmem_limit = _plan_tiles(nk, hw, itemsize)
    num_tiles = _cdiv(nk, tile_rows)

    cost = pl.CostEstimate(
        flops=3 * nk * hw,
        transcendentals=0,
        bytes_accessed=2 * nk * hw * itemsize + 4 * nk,
    )

    row_loss = pl.pallas_call(
        functools.partial(_row_mse_kernel, inv_hw_half=0.5 / float(hw)),
        out_shape=jax.ShapeDtypeStruct((nk, 1), jnp.float32),
        grid=(num_tiles,),
        in_specs=[
            pl.BlockSpec((tile_rows, hw), lambda i: (i, 0)),
            pl.BlockSpec((tile_rows, hw), lambda i: (i, 0)),
        ],
        out_specs=pl.BlockSpec((tile_rows, 1), lambda i: (i, 0)),
        compiler_params=pltpu.CompilerParams(
            dimension_semantics=("parallel",),
            vmem_limit_bytes=vmem_limit,
        ),
        cost_estimate=cost,
    )(pred, gt)

    loss_mat = row_loss.reshape(N, K)

    if use_target_weight:
        w_mat = target_weight.reshape(N, K).astype(jnp.float32)
        out = pl.pallas_call(
            functools.partial(_ohkm_weighted_kernel, topk=topk),
            out_shape=jax.ShapeDtypeStruct((1, 1), jnp.float32),
            in_specs=[pl.BlockSpec(memory_space=pltpu.MemorySpace.VMEM),
                      pl.BlockSpec(memory_space=pltpu.MemorySpace.VMEM)],
            out_specs=pl.BlockSpec(memory_space=pltpu.MemorySpace.SMEM),
        )(loss_mat, w_mat)
    else:
        out = pl.pallas_call(
            functools.partial(_ohkm_plain_kernel, topk=topk),
            out_shape=jax.ShapeDtypeStruct((1, 1), jnp.float32),
            in_specs=[pl.BlockSpec(memory_space=pltpu.MemorySpace.VMEM)],
            out_specs=pl.BlockSpec(memory_space=pltpu.MemorySpace.SMEM),
        )(loss_mat)
    return out[0, 0]


# ----------------------------------------------------------------------------
# Pure-JAX reference mirroring the PyTorch module exactly.
# ----------------------------------------------------------------------------
def _reference_loss(output, target, target_weight, use_target_weight=True, topk=8):
    N, K, H, W = output.shape
    pred = output.reshape(N, K, H * W).astype(jnp.float32)
    gt = target.reshape(N, K, H * W).astype(jnp.float32)
    if use_target_weight:
        w = target_weight.reshape(N, K, 1).astype(jnp.float32)
        pred = pred * w
        gt = gt * w
    per_joint = 0.5 * jnp.mean((pred - gt) ** 2, axis=2)  # (N, K)
    topv, _ = lax.top_k(per_joint, topk)                  # (N, topk)
    per_sample = jnp.sum(topv, axis=1) / topk
    return jnp.mean(per_sample)


if __name__ == "__main__":
    key = jax.random.PRNGKey(0)
    k1, k2, k3 = jax.random.split(key, 3)

    # Case 1: standard shapes (batch=2, joints=16, 16x16 heatmaps).
    N, K, H, W = 2, 16, 16, 16
    topk = 8
    output = jax.random.normal(k1, (N, K, H, W), dtype=jnp.float32)
    target = jax.random.normal(k2, (N, K, H, W), dtype=jnp.float32)
    target_weight = jax.random.uniform(k3, (N, K, 1), dtype=jnp.float32)

    loss = jax.block_until_ready(
        joints_ohkm_mse_loss(output, target, target_weight,
                             use_target_weight=True, topk=topk))
    ref = jax.block_until_ready(
        _reference_loss(output, target, target_weight, True, topk))
    assert jnp.allclose(loss, ref, rtol=1e-5, atol=1e-6), (loss, ref)

    loss2 = jax.block_until_ready(
        joints_ohkm_mse_loss(output, target, target_weight,
                             use_target_weight=False, topk=topk))
    ref2 = jax.block_until_ready(
        _reference_loss(output, target, target_weight, False, topk))
    assert jnp.allclose(loss2, ref2, rtol=1e-5, atol=1e-6), (loss2, ref2)

    # Case 2: odd sizes -> exercises the ragged (non-divisible) grid path.
    k4, k5, k6 = jax.random.split(jax.random.PRNGKey(1), 3)
    N2, K2, H2, W2, topk2 = 3, 17, 12, 12, 5
    out_b = jax.random.normal(k4, (N2, K2, H2, W2), dtype=jnp.float32)
    tgt_b = jax.random.normal(k5, (N2, K2, H2, W2), dtype=jnp.float32)
    w_b = jax.random.uniform(k6, (N2, K2, 1), dtype=jnp.float32)
    loss3 = jax.block_until_ready(
        joints_ohkm_mse_loss(out_b, tgt_b, w_b, use_target_weight=True, topk=topk2))
    ref3 = jax.block_until_ready(_reference_loss(out_b, tgt_b, w_b, True, topk2))
    assert jnp.allclose(loss3, ref3, rtol=1e-5, atol=1e-6), (loss3, ref3)

    print("KERNEL_OK")
</pallas_src>

<mosaic_0001>
module attributes {stable_mosaic.version = 11 : i64} {
  func.func @_row_mse_kernel(%arg0: i32, %arg1: memref<16x256xf32, #tpu.memory_space<vmem>>, %arg2: memref<16x256xf32, #tpu.memory_space<vmem>>, %arg3: memref<16x1xf32, #tpu.memory_space<vmem>>) attributes {dimension_semantics = [#tpu.dimension_semantics<parallel>], iteration_bounds = array<i64: 2>, scalar_prefetch = 0 : i64, scratch_operands = 0 : i64, tpu.core_type = #tpu.core_type<tc>, window_params = [{transform_indices = @transform_0, window_bounds = array<i64: 16, 256>}, {transform_indices = @transform_1, window_bounds = array<i64: 16, 256>}, {transform_indices = @transform_2, window_bounds = array<i64: 16, 1>}]} {
    %c0 = arith.constant 0 : index
    %c0_0 = arith.constant 0 : index
    %0 = vector.load %arg1[%c0, %c0_0] : memref<16x256xf32, #tpu.memory_space<vmem>>, vector<16x256xf32>
    %c0_1 = arith.constant 0 : index
    %c0_2 = arith.constant 0 : index
    %1 = vector.load %arg2[%c0_1, %c0_2] : memref<16x256xf32, #tpu.memory_space<vmem>>, vector<16x256xf32>
    %2 = arith.subf %0, %1 : vector<16x256xf32>
    %3 = arith.mulf %2, %2 : vector<16x256xf32>
    %cst = arith.constant dense<0.000000e+00> : vector<16xf32>
    %4 = vector.multi_reduction <add>, %3, %cst [1] : vector<16x256xf32> to vector<16xf32>
    %5 = vector.shape_cast %4 : vector<16xf32> to vector<16x1xf32>
    %cst_3 = arith.constant 0.001953125 : f32
    %6 = vector.broadcast %cst_3 : f32 to vector<16x1xf32>
    %7 = arith.mulf %5, %6 : vector<16x1xf32>
    %c0_4 = arith.constant 0 : index
    %c0_5 = arith.constant 0 : index
    %8 = vector.load %arg3[%c0_4, %c0_5] : memref<16x1xf32, #tpu.memory_space<vmem>>, vector<16x1xf32>
    tpu.vector_store %arg3[%c0_4, %c0_5], %7 {strides = array<i32>} : memref<16x1xf32, #tpu.memory_space<vmem>>, vector<16x1xf32>,
    return
  }
  func.func @transform_0(%arg0: i32) -> (i32, i32) {
    %c0_i32 = arith.constant 0 : i32
    %c0_i32_0 = arith.constant 0 : i32
    return %arg0, %c0_i32 : i32, i32
  }
  func.func @transform_1(%arg0: i32) -> (i32, i32) {
    %c0_i32 = arith.constant 0 : i32
    %c0_i32_0 = arith.constant 0 : i32
    return %arg0, %c0_i32 : i32, i32
  }
  func.func @transform_2(%arg0: i32) -> (i32, i32) {
    %c0_i32 = arith.constant 0 : i32
    %c0_i32_0 = arith.constant 0 : i32
    return %arg0, %c0_i32 : i32, i32
  }
}

</mosaic_0001>

<llo_original>
// kernel: tpu_custom_call.1
$region0: #{tpu_custom_call.1}
  #allocation0 [shape = 'u32[]', space=smem, size = 0x4, offset = 0x4, fixed_abs, tag = 'smem constant byte address 0x4 - core index']
  #allocation1 [shape = 'u32[72,128]{1,0:T(1,128)}', space=vmem, size = 0x9000, scoped, tag = 'internal scratch']
  %s0 = inlined_call_operand.hbm [shape: f32[32,256], index: 0, kind: input, shape index: {}]
  %s1 = inlined_call_operand.hbm [shape: f32[32,256], index: 1, kind: input, shape index: {}]
  %s2 = inlined_call_operand.vmem [shape: f32[32,1], index: 2, kind: output, shape index: {}]
  %s3 = sld [smem:[#allocation0]]
  $region49: #{tpu_custom_call.1} parent=0
    _
  %s5 = ssub.s32 1, %s3
  %s6 = scalar_select 0, %s5, %s3
  $region1: #{tpu_custom_call.1} parent=0
    #allocation2 [shape = 'u8[32768]{0}', space=vmem, size = 0x8000, scoped, tag = 'input window, operand 0']
    #allocation3 [shape = 's32[2]{0}', space=sflag, size = 0x8, scoped, tag = 'scoped memory for tpu_custom_call.1']
    #allocation4 [shape = 'u8[32768]{0}', space=vmem, size = 0x8000, scoped, tag = 'input window, operand 1']
    #allocation5 [shape = 's32[2]{0}', space=sflag, size = 0x8, scoped, tag = 'scoped memory for tpu_custom_call.1']
    %7 = vsyncpa [#allocation3], 0
    %s8 = scalar_lea.sflag [#allocation3], 1
    %9 = vsyncpa %s8, 0
    %10 = vsyncpa [#allocation5], 0
    %s11 = scalar_lea.sflag [#allocation5], 1
    %12 = vsyncpa %s11, 0
    loop: start=0, step=1, limit=4
    $region2: #{tpu_custom_call.1} parent=1 // loop_pre_header
      _
    $region3: #{tpu_custom_call.1} parent=1 // loop_header
      %s14 = sphi 0, %s18
      %p15 = scmp.ge.s32.totalorder %s14, 4
      %s24 = sphi 0, %s26
      %s27 = sphi 0, %s24
      %s28 = sphi 0, %s27
      %s44 = sphi 0, %s28
      %s50 = sphi 0, %s52
      %s53 = sphi 0, %s50
      %s54 = sphi 0, %s53
      %s70 = sphi 0, %s54
      %s76 = sphi 0, %s78
      %s79 = sphi 0, %s76
      %s80 = sphi 0, %s79
      %s96 = sphi 0, %s80
    $region4: #{tpu_custom_call.1} parent=1 // loop_header_branch
      %17 = sbr.rel (%p15) target = $region8
    $region5: #{tpu_custom_call.1} parent=1 // loop_body
      %s19 = ssub.s32 %s14, 1
      %s20 = ssub.s32 %s14, 2
      %s21 = sadd.s32 %s14, 1
      %s22 = ssub.s32 %s14, %s21
      %p23 = scmp.eq.s32.totalorder %s22, 0
      %s25 = sadd.s32 %s24, 1
      %s26 = scalar_select %p23, %s24, %s25
      %p29 = pneg %p23
      %p30 = scmp.eq.s32.totalorder %s14, 1
      %p31 = por %p29, %p30
      %p32 = scmp.ne.s32.totalorder %s24, %s27
      %p33 = scmp.eq.s32.totalorder %s14, 0
      %p34 = por %p32, %p33
      %p35 = scmp.ne.s32.totalorder %s24, %s27
      %p36 = scmp.eq.s32.totalorder %s19, 1
      %p37 = por %p35, %p36
      %p38 = scmp.ne.s32.totalorder %s27, %s28
      %p39 = scmp.eq.s32.totalorder %s19, 0
      %p40 = por %p38, %p39
      %p41 = scmp.ne.s32.totalorder %s27, %s28
      %p42 = scmp.eq.s32.totalorder %s20, 1
      %p43 = por %p41, %p42
      %p45 = scmp.ne.s32.totalorder %s28, %s44
      %p46 = scmp.eq.s32.totalorder %s20, 0
      %p47 = por %p45, %p46
      %s48 = ssub.s32 %s14, %s21
      %p49 = scmp.eq.s32.totalorder %s48, 0
      %s51 = sadd.s32 %s50, 1
      %s52 = scalar_select %p49, %s50, %s51
      %p55 = pneg %p49
      %p56 = scmp.eq.s32.totalorder %s14, 1
      %p57 = por %p55, %p56
      %p58 = scmp.ne.s32.totalorder %s50, %s53
      %p59 = scmp.eq.s32.totalorder %s14, 0
      %p60 = por %p58, %p59
      %p61 = scmp.ne.s32.totalorder %s50, %s53
      %p62 = scmp.eq.s32.totalorder %s19, 1
      %p63 = por %p61, %p62
      %p64 = scmp.ne.s32.totalorder %s53, %s54
      %p65 = scmp.eq.s32.totalorder %s19, 0
      %p66 = por %p64, %p65
      %p67 = scmp.ne.s32.totalorder %s53, %s54
      %p68 = scmp.eq.s32.totalorder %s20, 1
      %p69 = por %p67, %p68
      %p71 = scmp.ne.s32.totalorder %s54, %s70
      %p72 = scmp.eq.s32.totalorder %s20, 0
      %p73 = por %p71, %p72
      %s74 = ssub.s32 %s14, %s21
      %p75 = scmp.eq.s32.totalorder %s74, 0
      %s77 = sadd.s32 %s76, 1
      %s78 = scalar_select %p75, %s76, %s77
      %p81 = pneg %p75
      %p82 = scmp.eq.s32.totalorder %s14, 1
      %p83 = por %p81, %p82
      %p84 = scmp.ne.s32.totalorder %s76, %s79
      %p85 = scmp.eq.s32.totalorder %s14, 0
      %p86 = por %p84, %p85
      %p87 = scmp.ne.s32.totalorder %s76, %s79
      %p88 = scmp.eq.s32.totalorder %s19, 1
      %p89 = por %p87, %p88
      %p90 = scmp.ne.s32.totalorder %s79, %s80
      %p91 = scmp.eq.s32.totalorder %s19, 0
      %p92 = por %p90, %p91
      %p93 = scmp.ne.s32.totalorder %s79, %s80
      %p94 = scmp.eq.s32.totalorder %s20, 1
      %p95 = por %p93, %p94
      %p97 = scmp.ne.s32.totalorder %s80, %s96
      %p98 = scmp.eq.s32.totalorder %s20, 0
      %p99 = por %p97, %p98
      %p100 = scmp.le.s32.totalorder 1, %s14
      %p101 = scmp.lt.s32.totalorder %s14, 3
      %p102 = pnand %p100, %p101
      %p103 = pneg %p102
      // Predicated region
      $region9: #{tpu_custom_call.1} parent=5 // pred_check
        _
      $region10: #{tpu_custom_call.1} parent=5 // pred_check_branch
        %105 = sbr.rel (%p102) target = $region12
      $region11: #{tpu_custom_call.1} parent=5 // pred_region
        %s106 = ssub.s32 %s14, 1
      $region12: #{tpu_custom_call.1} parent=5 // pred_fallthru
        _
      %p107 = scmp.lt.s32.totalorder %s14, 2
      // Predicated region
      $region13: #{tpu_custom_call.1} parent=5 // pred_check
        %p108 = pneg %p107
      $region14: #{tpu_custom_call.1} parent=5 // pred_check_branch
        %110 = sbr.rel (%p108) target = $region16
      $region15: #{tpu_custom_call.1} parent=5 // pred_region
        // Predicated region
        $region17: #{tpu_custom_call.1} parent=15 // pred_check
          %p111 = pneg %p34
        $region18: #{tpu_custom_call.1} parent=15 // pred_check_branch
          %113 = sbr.rel (%p111) target = $region20
        $region19: #{tpu_custom_call.1} parent=15 // pred_region
          %s114 = sand.u32 %s24, 1
          %s115 = scalar_lea.sflag [#allocation3], %s114
          %s116 = sand.u32 %s24, 1
          %s117 = smul.addr %s116, 32
          %s118 = scalar_lea.vmem [#allocation2], %s117
          %s119 = smul.u32 2, %s14
          %121 = vsyncadd %s115, 0
          %s122 = smul.addr %s119, 2
          %s123 = smul.addr %s122, 8
          %s124 = scalar_lea.hbm %s0, %s123
          %s125 = sshll.u32 %s124, 4
          %s126 = int_to_ptr.hbm [resolvable:$true] %s125
          %s127 = sshll.u32 %s118, 4
          %s128 = int_to_ptr.vmem [resolvable:$true] %s127
          %133 = dma.hbm_to_vmem [thread:$0]  %s126, 512, %s128, %s115, 256, 256, 16
        $region20: #{tpu_custom_call.1} parent=15 // pred_fallthru
          _
        // Predicated region
        $region21: #{tpu_custom_call.1} parent=15 // pred_check
          %p134 = pneg %p60
        $region22: #{tpu_custom_call.1} parent=15 // pred_check_branch
          %136 = sbr.rel (%p134) target = $region24
        $region23: #{tpu_custom_call.1} parent=15 // pred_region
          %s137 = sand.u32 %s50, 1
          %s138 = scalar_lea.sflag [#allocation5], %s137
          %s139 = sand.u32 %s50, 1
          %s140 = smul.addr %s139, 32
          %s141 = scalar_lea.vmem [#allocation4], %s140
          %s142 = smul.u32 2, %s14
          %144 = vsyncadd %s138, 0
          %s145 = smul.addr %s142, 2
          %s146 = smul.addr %s145, 8
          %s147 = scalar_lea.hbm %s1, %s146
          %s148 = sshll.u32 %s147, 4
          %s149 = int_to_ptr.hbm [resolvable:$true] %s148
          %s150 = sshll.u32 %s141, 4
          %s151 = int_to_ptr.vmem [resolvable:$true] %s150
          %156 = dma.hbm_to_vmem [thread:$0]  %s149, 512, %s151, %s138, 256, 256, 16
        $region24: #{tpu_custom_call.1} parent=15 // pred_fallthru
          _
      $region16: #{tpu_custom_call.1} parent=5 // pred_fallthru
        _
      %p157 = scmp.le.s32.totalorder 1, %s14
      %p158 = scmp.lt.s32.totalorder %s14, 3
      %p159 = pnand %p157, %p158
      %p160 = pneg %p159
      // Predicated region
      $region25: #{tpu_custom_call.1} parent=5 // pred_check
        _
      $region26: #{tpu_custom_call.1} parent=5 // pred_check_branch
        %162 = sbr.rel (%p159) target = $region28
      $region27: #{tpu_custom_call.1} parent=5 // pred_region
        %s163 = ssub.s32 %s14, 1
        %s164 = sand.u32 %s27, 1
        %s165 = scalar_lea.sflag [#allocation3], %s164
        %s166 = sand.u32 %s27, 1
        %s167 = smul.addr %s166, 32
        %s168 = scalar_lea.vmem [#allocation2], %s167
        // Predicated region
        $region29: #{tpu_custom_call.1} parent=27 // pred_check
          %p169 = pneg %p40
        $region30: #{tpu_custom_call.1} parent=27 // pred_check_branch
          %171 = sbr.rel (%p169) target = $region32
        $region31: #{tpu_custom_call.1} parent=27 // pred_region
          %173 = dma.done %s165, 512
        $region32: #{tpu_custom_call.1} parent=27 // pred_fallthru
          _
        %s174 = sand.u32 %s53, 1
        %s175 = scalar_lea.sflag [#allocation5], %s174
        %s176 = sand.u32 %s53, 1
        %s177 = smul.addr %s176, 32
        %s178 = scalar_lea.vmem [#allocation4], %s177
        // Predicated region
        $region33: #{tpu_custom_call.1} parent=27 // pred_check
          %p179 = pneg %p66
        $region34: #{tpu_custom_call.1} parent=27 // pred_check_branch
          %181 = sbr.rel (%p179) target = $region36
        $region35: #{tpu_custom_call.1} parent=27 // pred_region
          %183 = dma.done %s175, 512
        $region36: #{tpu_custom_call.1} parent=27 // pred_fallthru
          _
        %s184 = sand.u32 %s27, 1
        %s185 = scalar_lea.sflag [#allocation3], %s184
        %s186 = sand.u32 %s27, 1
        %s187 = smul.addr %s186, 32
        %s188 = scalar_lea.vmem [#allocation2], %s187
        %p189 = pneg %p40
        %p190 = pneg %p37
        %s191 = sand.u32 %s53, 1
        %s192 = scalar_lea.sflag [#allocation5], %s191
        %s193 = sand.u32 %s53, 1
        %s194 = smul.addr %s193, 32
        %s195 = scalar_lea.vmem [#allocation4], %s194
        %p196 = pneg %p66
        %p197 = pneg %p63
        %p198 = pneg %p92
        %p199 = pneg %p89
        %s200 = smul.u32 2, %s19
        %p201 = scmp.lt.s32.totalorder %s200, 3
        %s202 = scalar_select %p201, %s200, 3
        %s203 = smul.addr %s202, 8
        %s204 = scalar_lea.vmem %s2, %s203
        %s205 = smul.u32 2, %s19
        %s206 = smul.u32 2, %s19
        %s207 = smul.u32 2, %s19
        %p208 = scmp.lt.s32.totalorder %s207, 3
        %s209 = scalar_select %p208, %s207, 3
        %s210 = smul.addr %s209, 8
        %s211 = scalar_lea.vmem %s2, %s210
        %s212 = smul.u32 2, %s19
        %v213 = vld [vmem:[%s168] sm:$0xff]
        %v214 = vld [vmem:[%s168 + $0x8] sm:$0xff]
        %v215 = vld [vmem:[%s168 + $0x10] sm:$0xff]
        %v216 = vld [vmem:[%s168 + $0x18] sm:$0xff]
        %v217 = vld [vmem:[%s178] sm:$0xff]
        %v218 = vld [vmem:[%s178 + $0x8] sm:$0xff]
        %v219 = vld [vmem:[%s178 + $0x10] sm:$0xff]
        %v220 = vld [vmem:[%s178 + $0x18] sm:$0xff]
        %v221 = vsub.f32 %v213, %v217
        %v222 = vsub.f32 %v214, %v218
        %v223 = vsub.f32 %v215, %v219
        %v224 = vsub.f32 %v216, %v220
        %v225 = vmul.f32 %v221, %v221
        %v226 = vmul.f32 %v222, %v222
        %v227 = vmul.f32 %v223, %v223
        %v228 = vmul.f32 %v224, %v224
        %v229 = vadd.f32 %v225, %v226
        %230 = vadd.xlane.f32.xlu0 %v229
        %v231 = vpop.xlane.xlu0 %230
        %v232 = vadd.f32 %v227, %v228
        %233 = vadd.xlane.f32.xlu0 %v232
        %v234 = vpop.xlane.xlu0 %233
        %v235 = vmul.f32 %v231, 0.001953125
        %v236 = vmul.f32 %v234, 0.001953125
        %vm237 = vcmask 7168
        %238 = vst.msk [vmem:[%s211] sm:$0xff] %vm237, %v235
        %239 = vst.msk [vmem:[%s211 + $0x8] sm:$0xff] %vm237, %v236
        %s240 = smul.u32 2, %s19
        %p241 = scmp.lt.s32.totalorder %s240, 3
        %s242 = scalar_select %p241, %s240, 3
        %s243 = smul.addr %s242, 8
        %s244 = scalar_lea.vmem %s2, %s243
        // Predicated region
        $region37: #{tpu_custom_call.1} parent=27 // pred_check
          %p245 = pneg %p89
        $region38: #{tpu_custom_call.1} parent=27 // pred_check_branch
          %247 = sbr.rel (%p245) target = $region40
        $region39: #{tpu_custom_call.1} parent=27 // pred_region
          %s248 = smul.u32 2, %s19
        $region40: #{tpu_custom_call.1} parent=27 // pred_fallthru
          _
      $region28: #{tpu_custom_call.1} parent=5 // pred_fallthru
        _
      %p249 = scmp.le.s32.totalorder 2, %s14
      // Predicated region
      $region41: #{tpu_custom_call.1} parent=5 // pred_check
        %p250 = pneg %p249
      $region42: #{tpu_custom_call.1} parent=5 // pred_check_branch
        %252 = sbr.rel (%p250) target = $region44
      $region43: #{tpu_custom_call.1} parent=5 // pred_region
        %s253 = ssub.s32 %s14, 2
        // Predicated region
        $region45: #{tpu_custom_call.1} parent=43 // pred_check
          %p254 = pneg %p95
        $region46: #{tpu_custom_call.1} parent=43 // pred_check_branch
          %256 = sbr.rel (%p254) target = $region48
        $region47: #{tpu_custom_call.1} parent=43 // pred_region
          %s257 = smul.u32 2, %s20
          %p258 = scmp.lt.s32.totalorder %s257, 3
          %s259 = scalar_select %p258, %s257, 3
          %s260 = smul.addr %s259, 8
          %s261 = scalar_lea.vmem %s2, %s260
        $region48: #{tpu_custom_call.1} parent=43 // pred_fallthru
          _
      $region44: #{tpu_custom_call.1} parent=5 // pred_fallthru
        _
    $region6: #{tpu_custom_call.1} parent=1 // loop_footer
      %s18 = sadd.s32 1, %s14
    $region7: #{tpu_custom_call.1} parent=1 // loop_footer_branch
      %13 = sbr.rel target = $region3
    $region8: #{tpu_custom_call.1} parent=1 // loop_exit
      _
    %262 = vsyncpa [#allocation3], 1
    %s263 = scalar_lea.sflag [#allocation3], 1
    %264 = vsyncpa %s263, 1
    %265 = vsyncpa [#allocation5], 1
    %s266 = scalar_lea.sflag [#allocation5], 1
    %267 = vsyncpa %s266, 1

</llo_original>
